<compile_context>
chip_gen: v7x
topology: tpu7x:2x2x1
jax: 0.10.0
libtpu: 0.0.40
codegen_flags: <defaults>
</compile_context>

<pallas_src>
import functools

import jax
import jax.numpy as jnp
from jax.experimental import pallas as pl
from jax.experimental.pallas import tpu as pltpu

NUM_JOINTS = 22
POSE6D_DIM = 6 * NUM_JOINTS          # 132
SHAPE_DIM = 11
CAM_DIM = 3


# --------------------------------------------------------------------------
# Fused Pallas kernel: conv_out (3x3, pad=1, C->1) + rotation_6d_to_matrix.
# --------------------------------------------------------------------------
def _fused_kernel(x_ref, w_ref, b_ref, noise_ref, rot_ref, *, B, C, H, W, GW):
    HW = H * W
    BC = B * C
    f32 = jnp.float32

    # ---- 3x3 conv on one full (B*C, HW) sublane-packed tile -----------------
    # Rows of x are (c, b) pairs (c-major: row = c*B + b); taps are generated
    # with lane rotations + border masks instead of shifted window slices.
    x = x_ref[...].astype(f32)                                     # (BC, HW)

    lane = jax.lax.broadcasted_iota(jnp.int32, (BC, HW), 1)
    col = lane & (W - 1)                                           # i % W (W pow2)
    not_left = (col != 0).astype(f32)                              # valid for kx = 0
    not_right = (col != (W - 1)).astype(f32)                       # valid for kx = 2
    not_top = lane >= W                                            # valid for ky = 0
    not_bot = lane < (HW - W)                                      # valid for ky = 2

    acc_l = jnp.zeros((BC, HW), f32)
    acc_c = jnp.zeros((BC, HW), f32)
    acc_r = jnp.zeros((BC, HW), f32)
    for ky in range(3):
        if ky == 0:     # y[p] = x[p - W], zero on the top row (roll wraps)
            xv = jnp.where(not_top, pltpu.roll(x, shift=W, axis=1), 0.0)
        elif ky == 1:
            xv = x
        else:           # y[p] = x[p + W], zero on the bottom row
            xv = jnp.where(not_bot, pltpu.roll(x, shift=HW - W, axis=1), 0.0)
        # Per-sublane (per (c,b)-row) weight columns, lane-broadcast.
        w_l = w_ref[:, ky * 3 + 0:ky * 3 + 1]
        w_c = w_ref[:, ky * 3 + 1:ky * 3 + 2]
        w_r = w_ref[:, ky * 3 + 2:ky * 3 + 3]
        acc_l = acc_l + pltpu.roll(xv, shift=1, axis=1) * w_l       # y[p] = xv[p-1]
        acc_c = acc_c + xv * w_c
        acc_r = acc_r + pltpu.roll(xv, shift=HW - 1, axis=1) * w_r  # y[p] = xv[p+1]

    acc = acc_l * not_left + acc_c + acc_r * not_right              # (BC, HW)

    # Channel reduce: rows c*B + b  ->  (B, HW).
    out = acc[0:B, :]
    for c in range(1, C):
        out = out + acc[c * B:(c + 1) * B, :]
    out = out + b_ref[0]
    noise_ref[...] = out.astype(noise_ref.dtype)                    # full-lane store

    # ---- rotation_6d_to_matrix epilogue (pytorch3d semantics, eps=1e-12) ----
    # Work directly on the interleaved layout: lane 6*j + k holds component k of
    # joint j.  Five lane rotations align all six components at lanes 6*j; all
    # math is pure VPU elementwise (garbage in the other lanes is never read).
    head = out if HW == GW else out[:, :GW]                         # lane-aligned
    x1 = head
    y1 = pltpu.roll(head, shift=GW - 1, axis=1)                     # head[p + 1]
    z1 = pltpu.roll(head, shift=GW - 2, axis=1)
    x2 = pltpu.roll(head, shift=GW - 3, axis=1)
    y2 = pltpu.roll(head, shift=GW - 4, axis=1)
    z2 = pltpu.roll(head, shift=GW - 5, axis=1)

    eps2 = 1e-24                                                    # (1e-12)**2
    inv1 = jax.lax.rsqrt(jnp.maximum(x1 * x1 + y1 * y1 + z1 * z1, eps2))
    b1x, b1y, b1z = x1 * inv1, y1 * inv1, z1 * inv1
    d = b1x * x2 + b1y * y2 + b1z * z2
    u2x, u2y, u2z = x2 - d * b1x, y2 - d * b1y, z2 - d * b1z
    inv2 = jax.lax.rsqrt(jnp.maximum(u2x * u2x + u2y * u2y + u2z * u2z, eps2))
    b2x, b2y, b2z = u2x * inv2, u2y * inv2, u2z * inv2
    b3x = b1y * b2z - b1z * b2y
    b3y = b1z * b2x - b1x * b2z
    b3z = b1x * b2y - b1y * b2x

    # Nine full-lane (B, GW) stores (lane-dense; wrapper slices [0:132:6]).
    rot_ref[0] = b1x
    rot_ref[1] = b1y
    rot_ref[2] = b1z
    rot_ref[3] = b2x
    rot_ref[4] = b2y
    rot_ref[5] = b2z
    rot_ref[6] = b3x
    rot_ref[7] = b3y
    rot_ref[8] = b3z


def denoise_and_decode(latents, conv_w, conv_b):
    """Fused UNet conv_out stand-in + 6D-rotation decode.

    latents: (B, C, H, W) NCHW; conv_w: (1, C, 3, 3); conv_b: (1,).
    Returns (noise_pred (B,1,H,W), noise_flat (B,H*W), pred_pose (B,22,3,3)).
    """
    B, C, H, W = latents.shape
    HW = H * W
    assert HW >= POSE6D_DIM + SHAPE_DIM + CAM_DIM, "latent spatial size too small"
    assert (W & (W - 1)) == 0, "kernel assumes W is a power of two"
    GW = HW if HW <= 256 else 256            # rot6d working width (lane-aligned)
    assert GW >= POSE6D_DIM + 5

    # (B, C, H, W) -> (C*B, HW): c-major rows so the in-kernel channel reduce is
    # C-1 adds of contiguous B-row groups.  No halo padding needed anymore.
    x_packed = latents.astype(jnp.float32).transpose(1, 0, 2, 3).reshape(C * B, HW)

    # Per-row 3x3 weights (row c*B + b gets channel c's 9 taps), padded to 128.
    w_rows = jnp.repeat(conv_w.reshape(C, 9).astype(jnp.float32), B, axis=0)
    w_packed = jnp.pad(w_rows, ((0, 0), (0, 128 - 9)))              # (C*B, 128)
    b_flat = conv_b.reshape(-1).astype(jnp.float32)                 # (1,) -> SMEM

    kernel = functools.partial(_fused_kernel, B=B, C=C, H=H, W=W, GW=GW)
    # NOTE: no grid — the whole problem is one block (per-step overhead would
    # dominate at this size).
    noise_flat, rot = pl.pallas_call(
        kernel,
        out_shape=(jax.ShapeDtypeStruct((B, HW), latents.dtype),
                   jax.ShapeDtypeStruct((9, B, GW), jnp.float32)),
        in_specs=[
            pl.BlockSpec((C * B, HW), lambda: (0, 0)),
            pl.BlockSpec((C * B, 128), lambda: (0, 0)),
            pl.BlockSpec(memory_space=pltpu.MemorySpace.SMEM),
        ],
        out_specs=(
            pl.BlockSpec((B, HW), lambda: (0, 0)),
            pl.BlockSpec((9, B, GW), lambda: (0, 0, 0)),
        ),
    )(x_packed, w_packed, b_flat)

    noise_pred = noise_flat.reshape(B, 1, H, W)
    # rot[r, b, 6*j] holds entry r of (b1|b2|b3) for joint (b, j).
    rot6 = rot[:, :, 0:POSE6D_DIM:6]                                # (9, B, 22)
    pred_pose = rot6.transpose(1, 2, 0).reshape(B, NUM_JOINTS, 3, 3)
    return noise_pred, noise_flat, pred_pose


# --------------------------------------------------------------------------
# SDPose forward (JAX glue around the fused Pallas kernel).
# --------------------------------------------------------------------------
def forward_smplx_params(pred_smplx_params, bbox_scale, bbox_center, img_w, img_h, fl):
    B = pred_smplx_params["pred_pose"].shape[0]
    if fl is not None:
        focal_length = fl
    else:
        focal_length = jnp.sqrt(img_w * img_w + img_h * img_h)
        # Faithful to the torch code: focal_length.repeat(2).view(B, 2).
        focal_length = jnp.tile(focal_length, (2,)).reshape(B, 2)
    cam_intrinsics = jnp.tile(jnp.eye(3, dtype=jnp.float32), (B, 1, 1))
    cam_intrinsics = cam_intrinsics.at[:, 0, 0].set(focal_length[:, 0])
    cam_intrinsics = cam_intrinsics.at[:, 1, 1].set(focal_length[:, 1])
    cam_intrinsics = cam_intrinsics.at[:, 0, 2].set(img_w / 2.0)
    cam_intrinsics = cam_intrinsics.at[:, 1, 2].set(img_h / 2.0)
    # TODO(synk): SMPLXCamHead / SMPLXCamHeadProj body-model forward (mesh LBS +
    # perspective projection) requires external SMPL-X assets; not reproduced.
    smpl_output = {"cam_intrinsics": cam_intrinsics,
                   "bbox_scale": bbox_scale, "bbox_center": bbox_center}
    smpl_output.update(pred_smplx_params)
    return smpl_output


def sdpose_forward(params, rgb_latents, bbox_scale, bbox_center, img_w, img_h, fl):
    # denoise_forward: tt = cat([timestep]); embed = empty_text_embed.repeat(B,1,1)
    # TODO(synk): full UNet backbone (cross-attn with embed, timestep cond) omitted;
    # only the explicitly re-initialized conv_out layer is implemented in Pallas.
    noise_pred, noise_flat, pred_pose = denoise_and_decode(
        rgb_latents, params["conv_out_w"], params["conv_out_b"])

    # decode_smplx_params (the rot6d part is computed inside the fused kernel).
    pred_pose_6d = noise_flat[:, :POSE6D_DIM]
    pred_shape = noise_flat[:, POSE6D_DIM:POSE6D_DIM + SHAPE_DIM]
    pred_cam = noise_flat[:, POSE6D_DIM + SHAPE_DIM:POSE6D_DIM + SHAPE_DIM + CAM_DIM]
    pred_smplx_params = {"pred_pose": pred_pose, "pred_cam": pred_cam,
                         "pred_shape": pred_shape, "pred_pose_6d": pred_pose_6d}

    pred = forward_smplx_params(pred_smplx_params, bbox_scale, bbox_center,
                                img_w, img_h, fl)
    pred["noise_pred"] = noise_pred
    return pred


# --------------------------------------------------------------------------
# Plain-JAX references for verification.
# --------------------------------------------------------------------------
def _conv_ref(latents, weight, bias):
    out = jax.lax.conv_general_dilated(
        latents, weight, window_strides=(1, 1), padding=((1, 1), (1, 1)),
        dimension_numbers=("NCHW", "OIHW", "NCHW"))
    return out + bias.reshape(1, 1, 1, 1)


def _rot6d_ref(d6):
    a1, a2 = d6[:, :3], d6[:, 3:]
    eps = 1e-12
    b1 = a1 / jnp.maximum(jnp.linalg.norm(a1, axis=-1, keepdims=True), eps)
    u2 = a2 - jnp.sum(b1 * a2, axis=-1, keepdims=True) * b1
    b2 = u2 / jnp.maximum(jnp.linalg.norm(u2, axis=-1, keepdims=True), eps)
    b3 = jnp.cross(b1, b2)
    return jnp.stack([b1, b2, b3], axis=-2)


if __name__ == "__main__":
    key = jax.random.PRNGKey(0)
    k1, k2, k3, k4, k5 = jax.random.split(key, 5)

    B, C, H, W = 2, 4, 16, 16           # latent spatial 16x16 -> 256 >= 146 params
    rgb_latents = jax.random.normal(k1, (B, C, H, W), jnp.float32)
    bbox_scale = jnp.abs(jax.random.normal(k2, (B,), jnp.float32)) + 1.0
    bbox_center = jax.random.normal(k3, (B, 2), jnp.float32) * 10.0 + 112.0
    img_w = jnp.full((B,), 224.0, jnp.float32)
    img_h = jnp.full((B,), 224.0, jnp.float32)
    fl = jnp.abs(jax.random.normal(k4, (B, 2), jnp.float32)) * 100.0 + 500.0

    # Deterministic synthetic parameters (UNet conv_out analogue: C -> 1, 3x3).
    params = {
        "conv_out_w": jax.random.normal(k5, (1, C, 3, 3), jnp.float32) * 0.02,
        "conv_out_b": jnp.array([0.01], jnp.float32),
        # empty_text_embed buffer (SD2: (1, 77, 1024)); unused without UNet backbone.
        "empty_text_embed": jnp.zeros((1, 77, 1024), jnp.float32),
    }

    fwd = jax.jit(sdpose_forward)
    pred = jax.block_until_ready(
        fwd(params, rgb_latents, bbox_scale, bbox_center, img_w, img_h, fl))

    # Verify the fused Pallas kernel against plain-JAX references.
    np_ref = _conv_ref(rgb_latents, params["conv_out_w"], params["conv_out_b"])
    assert jnp.allclose(pred["noise_pred"], np_ref, atol=1e-4, rtol=1e-4)

    d6 = pred["noise_pred"].reshape(B, -1)[:, :POSE6D_DIM].reshape(-1, 6)
    rot_ref = _rot6d_ref(d6).reshape(B, -1, 3, 3)
    assert jnp.allclose(pred["pred_pose"], rot_ref, atol=1e-5, rtol=1e-5)

    assert pred["pred_pose"].shape == (B, NUM_JOINTS, 3, 3)
    assert pred["pred_shape"].shape == (B, SHAPE_DIM)
    assert pred["pred_cam"].shape == (B, CAM_DIM)
    assert pred["pred_pose_6d"].shape == (B, POSE6D_DIM)
    assert pred["cam_intrinsics"].shape == (B, 3, 3)

    print("KERNEL_OK")
</pallas_src>

<mosaic_0001>
module attributes {stable_mosaic.version = 11 : i64} {
  func.func @_fused_kernel(%arg0: memref<8x256xf32, #tpu.memory_space<vmem>>, %arg1: memref<8x128xf32, #tpu.memory_space<vmem>>, %arg2: memref<1xf32, #tpu.memory_space<smem>>, %arg3: memref<2x256xf32, #tpu.memory_space<vmem>>, %arg4: memref<9x2x256xf32, #tpu.memory_space<vmem>>) attributes {dimension_semantics = [], scalar_prefetch = 0 : i64, scratch_operands = 0 : i64, tpu.core_type = #tpu.core_type<tc>} {
    %c0 = arith.constant 0 : index
    %c0_0 = arith.constant 0 : index
    %0 = vector.load %arg0[%c0, %c0_0] : memref<8x256xf32, #tpu.memory_space<vmem>>, vector<8x256xf32>
    %1 = tpu.iota {dimensions = array<i32: 1>} : vector<8x256xi32>
    %c15_i32 = arith.constant 15 : i32
    %2 = vector.broadcast %c15_i32 : i32 to vector<8x256xi32>
    %3 = arith.andi %1, %2 : vector<8x256xi32>
    %c0_i32 = arith.constant 0 : i32
    %4 = vector.broadcast %c0_i32 : i32 to vector<8x256xi32>
    %5 = arith.cmpi ne, %3, %4 : vector<8x256xi32>
    %6 = arith.extui %5 : vector<8x256xi1> to vector<8x256xi32>
    %7 = arith.sitofp %6 : vector<8x256xi32> to vector<8x256xf32>
    %c15_i32_1 = arith.constant 15 : i32
    %8 = vector.broadcast %c15_i32_1 : i32 to vector<8x256xi32>
    %9 = arith.cmpi ne, %3, %8 : vector<8x256xi32>
    %10 = arith.extui %9 : vector<8x256xi1> to vector<8x256xi32>
    %11 = arith.sitofp %10 : vector<8x256xi32> to vector<8x256xf32>
    %c16_i32 = arith.constant 16 : i32
    %12 = vector.broadcast %c16_i32 : i32 to vector<8x256xi32>
    %13 = arith.cmpi sge, %1, %12 : vector<8x256xi32>
    %c240_i32 = arith.constant 240 : i32
    %14 = vector.broadcast %c240_i32 : i32 to vector<8x256xi32>
    %15 = arith.cmpi slt, %1, %14 : vector<8x256xi32>
    %cst = arith.constant 0.000000e+00 : f32
    %16 = vector.broadcast %cst : f32 to vector<8x256xf32>
    %cst_2 = arith.constant 0.000000e+00 : f32
    %17 = vector.broadcast %cst_2 : f32 to vector<8x256xf32>
    %cst_3 = arith.constant 0.000000e+00 : f32
    %18 = vector.broadcast %cst_3 : f32 to vector<8x256xf32>
    %c16_i32_4 = arith.constant 16 : i32
    %19 = tpu.dynamic_rotate %0 by %c16_i32_4 dim 1 : vector<8x256xf32>, i32 -> vector<8x256xf32>
    %cst_5 = arith.constant 0.000000e+00 : f32
    %20 = vector.broadcast %cst_5 : f32 to vector<8x256xf32>
    %21 = arith.select %13, %19, %20 : vector<8x256xi1>, vector<8x256xf32>
    %c0_6 = arith.constant 0 : index
    %c0_7 = arith.constant 0 : index
    %22 = vector.load %arg1[%c0_6, %c0_7] : memref<8x128xf32, #tpu.memory_space<vmem>>, vector<8x1xf32>
    %c0_8 = arith.constant 0 : index
    %c1 = arith.constant 1 : index
    %23 = vector.load %arg1[%c0_8, %c1] : memref<8x128xf32, #tpu.memory_space<vmem>>, vector<8x1xf32>
    %c0_9 = arith.constant 0 : index
    %c2 = arith.constant 2 : index
    %24 = vector.load %arg1[%c0_9, %c2] : memref<8x128xf32, #tpu.memory_space<vmem>>, vector<8x1xf32>
    %c1_i32 = arith.constant 1 : i32
    %25 = tpu.dynamic_rotate %21 by %c1_i32 dim 1 : vector<8x256xf32>, i32 -> vector<8x256xf32>
    %26 = vector.broadcast %22 : vector<8x1xf32> to vector<8x256xf32>
    %27 = arith.mulf %25, %26 : vector<8x256xf32>
    %28 = arith.addf %16, %27 : vector<8x256xf32>
    %29 = vector.broadcast %23 : vector<8x1xf32> to vector<8x256xf32>
    %30 = arith.mulf %21, %29 : vector<8x256xf32>
    %31 = arith.addf %17, %30 : vector<8x256xf32>
    %c255_i32 = arith.constant 255 : i32
    %32 = tpu.dynamic_rotate %21 by %c255_i32 dim 1 : vector<8x256xf32>, i32 -> vector<8x256xf32>
    %33 = vector.broadcast %24 : vector<8x1xf32> to vector<8x256xf32>
    %34 = arith.mulf %32, %33 : vector<8x256xf32>
    %35 = arith.addf %18, %34 : vector<8x256xf32>
    %c0_10 = arith.constant 0 : index
    %c3 = arith.constant 3 : index
    %36 = vector.load %arg1[%c0_10, %c3] : memref<8x128xf32, #tpu.memory_space<vmem>>, vector<8x1xf32>
    %c0_11 = arith.constant 0 : index
    %c4 = arith.constant 4 : index
    %37 = vector.load %arg1[%c0_11, %c4] : memref<8x128xf32, #tpu.memory_space<vmem>>, vector<8x1xf32>
    %c0_12 = arith.constant 0 : index
    %c5 = arith.constant 5 : index
    %38 = vector.load %arg1[%c0_12, %c5] : memref<8x128xf32, #tpu.memory_space<vmem>>, vector<8x1xf32>
    %c1_i32_13 = arith.constant 1 : i32
    %39 = tpu.dynamic_rotate %0 by %c1_i32_13 dim 1 : vector<8x256xf32>, i32 -> vector<8x256xf32>
    %40 = vector.broadcast %36 : vector<8x1xf32> to vector<8x256xf32>
    %41 = arith.mulf %39, %40 : vector<8x256xf32>
    %42 = arith.addf %28, %41 : vector<8x256xf32>
    %43 = vector.broadcast %37 : vector<8x1xf32> to vector<8x256xf32>
    %44 = arith.mulf %0, %43 : vector<8x256xf32>
    %45 = arith.addf %31, %44 : vector<8x256xf32>
    %c255_i32_14 = arith.constant 255 : i32
    %46 = tpu.dynamic_rotate %0 by %c255_i32_14 dim 1 : vector<8x256xf32>, i32 -> vector<8x256xf32>
    %47 = vector.broadcast %38 : vector<8x1xf32> to vector<8x256xf32>
    %48 = arith.mulf %46, %47 : vector<8x256xf32>
    %49 = arith.addf %35, %48 : vector<8x256xf32>
    %c240_i32_15 = arith.constant 240 : i32
    %50 = tpu.dynamic_rotate %0 by %c240_i32_15 dim 1 : vector<8x256xf32>, i32 -> vector<8x256xf32>
    %cst_16 = arith.constant 0.000000e+00 : f32
    %51 = vector.broadcast %cst_16 : f32 to vector<8x256xf32>
    %52 = arith.select %15, %50, %51 : vector<8x256xi1>, vector<8x256xf32>
    %c0_17 = arith.constant 0 : index
    %c6 = arith.constant 6 : index
    %53 = vector.load %arg1[%c0_17, %c6] : memref<8x128xf32, #tpu.memory_space<vmem>>, vector<8x1xf32>
    %c0_18 = arith.constant 0 : index
    %c7 = arith.constant 7 : index
    %54 = vector.load %arg1[%c0_18, %c7] : memref<8x128xf32, #tpu.memory_space<vmem>>, vector<8x1xf32>
    %c0_19 = arith.constant 0 : index
    %c8 = arith.constant 8 : index
    %55 = vector.load %arg1[%c0_19, %c8] : memref<8x128xf32, #tpu.memory_space<vmem>>, vector<8x1xf32>
    %c1_i32_20 = arith.constant 1 : i32
    %56 = tpu.dynamic_rotate %52 by %c1_i32_20 dim 1 : vector<8x256xf32>, i32 -> vector<8x256xf32>
    %57 = vector.broadcast %53 : vector<8x1xf32> to vector<8x256xf32>
    %58 = arith.mulf %56, %57 : vector<8x256xf32>
    %59 = arith.addf %42, %58 : vector<8x256xf32>
    %60 = vector.broadcast %54 : vector<8x1xf32> to vector<8x256xf32>
    %61 = arith.mulf %52, %60 : vector<8x256xf32>
    %62 = arith.addf %45, %61 : vector<8x256xf32>
    %c255_i32_21 = arith.constant 255 : i32
    %63 = tpu.dynamic_rotate %52 by %c255_i32_21 dim 1 : vector<8x256xf32>, i32 -> vector<8x256xf32>
    %64 = vector.broadcast %55 : vector<8x1xf32> to vector<8x256xf32>
    %65 = arith.mulf %63, %64 : vector<8x256xf32>
    %66 = arith.addf %49, %65 : vector<8x256xf32>
    %67 = arith.mulf %59, %7 : vector<8x256xf32>
    %68 = arith.addf %67, %62 : vector<8x256xf32>
    %69 = arith.mulf %66, %11 : vector<8x256xf32>
    %70 = arith.addf %68, %69 : vector<8x256xf32>
    %71 = vector.extract_strided_slice %70 {offsets = [0, 0], sizes = [2, 256], strides = [1, 1]} : vector<8x256xf32> to vector<2x256xf32>
    %72 = vector.extract_strided_slice %70 {offsets = [2, 0], sizes = [2, 256], strides = [1, 1]} : vector<8x256xf32> to vector<2x256xf32>
    %73 = arith.addf %71, %72 : vector<2x256xf32>
    %74 = vector.extract_strided_slice %70 {offsets = [4, 0], sizes = [2, 256], strides = [1, 1]} : vector<8x256xf32> to vector<2x256xf32>
    %75 = arith.addf %73, %74 : vector<2x256xf32>
    %76 = vector.extract_strided_slice %70 {offsets = [6, 0], sizes = [2, 256], strides = [1, 1]} : vector<8x256xf32> to vector<2x256xf32>
    %77 = arith.addf %75, %76 : vector<2x256xf32>
    %c0_22 = arith.constant 0 : index
    %78 = memref.load %arg2[%c0_22] : memref<1xf32, #tpu.memory_space<smem>>
    %79 = vector.broadcast %78 : f32 to vector<2x256xf32>
    %80 = arith.addf %77, %79 : vector<2x256xf32>
    %c0_23 = arith.constant 0 : index
    %c0_24 = arith.constant 0 : index
    %81 = vector.load %arg3[%c0_23, %c0_24] : memref<2x256xf32, #tpu.memory_space<vmem>>, vector<2x256xf32>
    tpu.vector_store %arg3[%c0_23, %c0_24], %80 {strides = array<i32>} : memref<2x256xf32, #tpu.memory_space<vmem>>, vector<2x256xf32>,
    %c255_i32_25 = arith.constant 255 : i32
    %82 = tpu.dynamic_rotate %80 by %c255_i32_25 dim 1 : vector<2x256xf32>, i32 -> vector<2x256xf32>
    %c254_i32 = arith.constant 254 : i32
    %83 = tpu.dynamic_rotate %80 by %c254_i32 dim 1 : vector<2x256xf32>, i32 -> vector<2x256xf32>
    %c253_i32 = arith.constant 253 : i32
    %84 = tpu.dynamic_rotate %80 by %c253_i32 dim 1 : vector<2x256xf32>, i32 -> vector<2x256xf32>
    %c252_i32 = arith.constant 252 : i32
    %85 = tpu.dynamic_rotate %80 by %c252_i32 dim 1 : vector<2x256xf32>, i32 -> vector<2x256xf32>
    %c251_i32 = arith.constant 251 : i32
    %86 = tpu.dynamic_rotate %80 by %c251_i32 dim 1 : vector<2x256xf32>, i32 -> vector<2x256xf32>
    %87 = arith.mulf %80, %80 : vector<2x256xf32>
    %88 = arith.mulf %82, %82 : vector<2x256xf32>
    %89 = arith.addf %87, %88 : vector<2x256xf32>
    %90 = arith.mulf %83, %83 : vector<2x256xf32>
    %91 = arith.addf %89, %90 : vector<2x256xf32>
    %cst_26 = arith.constant 1.000000e-24 : f32
    %92 = vector.broadcast %cst_26 : f32 to vector<2x256xf32>
    %93 = arith.maximumf %91, %92 : vector<2x256xf32>
    %94 = math.rsqrt %93 : vector<2x256xf32>
    %95 = arith.mulf %80, %94 : vector<2x256xf32>
    %96 = arith.mulf %82, %94 : vector<2x256xf32>
    %97 = arith.mulf %83, %94 : vector<2x256xf32>
    %98 = arith.mulf %95, %84 : vector<2x256xf32>
    %99 = arith.mulf %96, %85 : vector<2x256xf32>
    %100 = arith.addf %98, %99 : vector<2x256xf32>
    %101 = arith.mulf %97, %86 : vector<2x256xf32>
    %102 = arith.addf %100, %101 : vector<2x256xf32>
    %103 = arith.mulf %102, %95 : vector<2x256xf32>
    %104 = arith.subf %84, %103 : vector<2x256xf32>
    %105 = arith.mulf %102, %96 : vector<2x256xf32>
    %106 = arith.subf %85, %105 : vector<2x256xf32>
    %107 = arith.mulf %102, %97 : vector<2x256xf32>
    %108 = arith.subf %86, %107 : vector<2x256xf32>
    %109 = arith.mulf %104, %104 : vector<2x256xf32>
    %110 = arith.mulf %106, %106 : vector<2x256xf32>
    %111 = arith.addf %109, %110 : vector<2x256xf32>
    %112 = arith.mulf %108, %108 : vector<2x256xf32>
    %113 = arith.addf %111, %112 : vector<2x256xf32>
    %cst_27 = arith.constant 1.000000e-24 : f32
    %114 = vector.broadcast %cst_27 : f32 to vector<2x256xf32>
    %115 = arith.maximumf %113, %114 : vector<2x256xf32>
    %116 = math.rsqrt %115 : vector<2x256xf32>
    %117 = arith.mulf %104, %116 : vector<2x256xf32>
    %118 = arith.mulf %106, %116 : vector<2x256xf32>
    %119 = arith.mulf %108, %116 : vector<2x256xf32>
    %120 = arith.mulf %96, %119 : vector<2x256xf32>
    %121 = arith.mulf %97, %118 : vector<2x256xf32>
    %122 = arith.subf %120, %121 : vector<2x256xf32>
    %123 = arith.mulf %97, %117 : vector<2x256xf32>
    %124 = arith.mulf %95, %119 : vector<2x256xf32>
    %125 = arith.subf %123, %124 : vector<2x256xf32>
    %126 = arith.mulf %95, %118 : vector<2x256xf32>
    %127 = arith.mulf %96, %117 : vector<2x256xf32>
    %128 = arith.subf %126, %127 : vector<2x256xf32>
    %c0_28 = arith.constant 0 : index
    %c0_29 = arith.constant 0 : index
    %c0_30 = arith.constant 0 : index
    %129 = vector.load %arg4[%c0_28, %c0_29, %c0_30] : memref<9x2x256xf32, #tpu.memory_space<vmem>>, vector<1x2x256xf32>
    %130 = vector.shape_cast %129 : vector<1x2x256xf32> to vector<2x256xf32>
    %131 = vector.shape_cast %95 : vector<2x256xf32> to vector<1x2x256xf32>
    tpu.vector_store %arg4[%c0_28, %c0_29, %c0_30], %131 {strides = array<i32>} : memref<9x2x256xf32, #tpu.memory_space<vmem>>, vector<1x2x256xf32>,
    %c1_31 = arith.constant 1 : index
    %c0_32 = arith.constant 0 : index
    %c0_33 = arith.constant 0 : index
    %132 = vector.load %arg4[%c1_31, %c0_32, %c0_33] : memref<9x2x256xf32, #tpu.memory_space<vmem>>, vector<1x2x256xf32>
    %133 = vector.shape_cast %132 : vector<1x2x256xf32> to vector<2x256xf32>
    %134 = vector.shape_cast %96 : vector<2x256xf32> to vector<1x2x256xf32>
    tpu.vector_store %arg4[%c1_31, %c0_32, %c0_33], %134 {strides = array<i32>} : memref<9x2x256xf32, #tpu.memory_space<vmem>>, vector<1x2x256xf32>,
    %c2_34 = arith.constant 2 : index
    %c0_35 = arith.constant 0 : index
    %c0_36 = arith.constant 0 : index
    %135 = vector.load %arg4[%c2_34, %c0_35, %c0_36] : memref<9x2x256xf32, #tpu.memory_space<vmem>>, vector<1x2x256xf32>
    %136 = vector.shape_cast %135 : vector<1x2x256xf32> to vector<2x256xf32>
    %137 = vector.shape_cast %97 : vector<2x256xf32> to vector<1x2x256xf32>
    tpu.vector_store %arg4[%c2_34, %c0_35, %c0_36], %137 {strides = array<i32>} : memref<9x2x256xf32, #tpu.memory_space<vmem>>, vector<1x2x256xf32>,
    %c3_37 = arith.constant 3 : index
    %c0_38 = arith.constant 0 : index
    %c0_39 = arith.constant 0 : index
    %138 = vector.load %arg4[%c3_37, %c0_38, %c0_39] : memref<9x2x256xf32, #tpu.memory_space<vmem>>, vector<1x2x256xf32>
    %139 = vector.shape_cast %138 : vector<1x2x256xf32> to vector<2x256xf32>
    %140 = vector.shape_cast %117 : vector<2x256xf32> to vector<1x2x256xf32>
    tpu.vector_store %arg4[%c3_37, %c0_38, %c0_39], %140 {strides = array<i32>} : memref<9x2x256xf32, #tpu.memory_space<vmem>>, vector<1x2x256xf32>,
    %c4_40 = arith.constant 4 : index
    %c0_41 = arith.constant 0 : index
    %c0_42 = arith.constant 0 : index
    %141 = vector.load %arg4[%c4_40, %c0_41, %c0_42] : memref<9x2x256xf32, #tpu.memory_space<vmem>>, vector<1x2x256xf32>
    %142 = vector.shape_cast %141 : vector<1x2x256xf32> to vector<2x256xf32>
    %143 = vector.shape_cast %118 : vector<2x256xf32> to vector<1x2x256xf32>
    tpu.vector_store %arg4[%c4_40, %c0_41, %c0_42], %143 {strides = array<i32>} : memref<9x2x256xf32, #tpu.memory_space<vmem>>, vector<1x2x256xf32>,
    %c5_43 = arith.constant 5 : index
    %c0_44 = arith.constant 0 : index
    %c0_45 = arith.constant 0 : index
    %144 = vector.load %arg4[%c5_43, %c0_44, %c0_45] : memref<9x2x256xf32, #tpu.memory_space<vmem>>, vector<1x2x256xf32>
    %145 = vector.shape_cast %144 : vector<1x2x256xf32> to vector<2x256xf32>
    %146 = vector.shape_cast %119 : vector<2x256xf32> to vector<1x2x256xf32>
    tpu.vector_store %arg4[%c5_43, %c0_44, %c0_45], %146 {strides = array<i32>} : memref<9x2x256xf32, #tpu.memory_space<vmem>>, vector<1x2x256xf32>,
    %c6_46 = arith.constant 6 : index
    %c0_47 = arith.constant 0 : index
    %c0_48 = arith.constant 0 : index
    %147 = vector.load %arg4[%c6_46, %c0_47, %c0_48] : memref<9x2x256xf32, #tpu.memory_space<vmem>>, vector<1x2x256xf32>
    %148 = vector.shape_cast %147 : vector<1x2x256xf32> to vector<2x256xf32>
    %149 = vector.shape_cast %122 : vector<2x256xf32> to vector<1x2x256xf32>
    tpu.vector_store %arg4[%c6_46, %c0_47, %c0_48], %149 {strides = array<i32>} : memref<9x2x256xf32, #tpu.memory_space<vmem>>, vector<1x2x256xf32>,
    %c7_49 = arith.constant 7 : index
    %c0_50 = arith.constant 0 : index
    %c0_51 = arith.constant 0 : index
    %150 = vector.load %arg4[%c7_49, %c0_50, %c0_51] : memref<9x2x256xf32, #tpu.memory_space<vmem>>, vector<1x2x256xf32>
    %151 = vector.shape_cast %150 : vector<1x2x256xf32> to vector<2x256xf32>
    %152 = vector.shape_cast %125 : vector<2x256xf32> to vector<1x2x256xf32>
    tpu.vector_store %arg4[%c7_49, %c0_50, %c0_51], %152 {strides = array<i32>} : memref<9x2x256xf32, #tpu.memory_space<vmem>>, vector<1x2x256xf32>,
    %c8_52 = arith.constant 8 : index
    %c0_53 = arith.constant 0 : index
    %c0_54 = arith.constant 0 : index
    %153 = vector.load %arg4[%c8_52, %c0_53, %c0_54] : memref<9x2x256xf32, #tpu.memory_space<vmem>>, vector<1x2x256xf32>
    %154 = vector.shape_cast %153 : vector<1x2x256xf32> to vector<2x256xf32>
    %155 = vector.shape_cast %128 : vector<2x256xf32> to vector<1x2x256xf32>
    tpu.vector_store %arg4[%c8_52, %c0_53, %c0_54], %155 {strides = array<i32>} : memref<9x2x256xf32, #tpu.memory_space<vmem>>, vector<1x2x256xf32>,
    return
  }
}

</mosaic_0001>

<llo_original>
// kernel: sdpose_forward.1
$region0: #{sdpose_forward.1}
  #allocation0 [shape = 'u32[]', space=smem, size = 0x4, offset = 0x4, fixed_abs, tag = 'smem constant byte address 0x4 - core index']
  #allocation1 [shape = 'u32[144,128]{1,0:T(1,128)}', space=vmem, size = 0x12000, scoped, tag = 'internal scratch']
  #allocation2 [shape = 'f32[1]{0:T(128)S(6)}', space=smem, size = 0x200, scoped, tag = 'scoped memory for sdpose_forward.1']
  %s0 = inlined_call_operand.vmem [shape: f32[8,256], index: 0, kind: input, shape index: {}]
  %s1 = inlined_call_operand.vmem [shape: f32[8,128], index: 1, kind: input, shape index: {}]
  %s2 = inlined_call_operand.<no memory space> [shape: f32[1], index: 2, kind: input, shape index: {}]
  %s3 = inlined_call_operand.vmem [shape: f32[2,256], index: 3, kind: output, shape index: {0}]
  %s4 = inlined_call_operand.vmem [shape: f32[9,2,256], index: 4, kind: output, shape index: {1}]
  %5 = xla_tuple %s3, %s4
  %s6 = sld [smem:[#allocation0]]
  $region30: #{sdpose_forward.1} parent=0
    _
  %s8 = ssub.s32 1, %s6
  %s9 = scalar_select 0, %s8, %s6
  %10 = sst [smem:[#allocation2]] %s2
  // Predicated region
  $region2: #{sdpose_forward.1} parent=0 // pred_check
    _
  $region3: #{sdpose_forward.1} parent=0 // pred_check_branch
    %12 = sbr.rel (0) target = $region5
  $region4: #{sdpose_forward.1} parent=0 // pred_region
    _
  $region5: #{sdpose_forward.1} parent=0 // pred_fallthru
    _
  // Predicated region
  $region6: #{sdpose_forward.1} parent=0 // pred_check
    _
  $region7: #{sdpose_forward.1} parent=0 // pred_check_branch
    %14 = sbr.rel (0) target = $region9
  $region8: #{sdpose_forward.1} parent=0 // pred_region
    _
  $region9: #{sdpose_forward.1} parent=0 // pred_fallthru
    _
  // Predicated region
  $region10: #{sdpose_forward.1} parent=0 // pred_check
    _
  $region11: #{sdpose_forward.1} parent=0 // pred_check_branch
    %16 = sbr.rel (0) target = $region13
  $region12: #{sdpose_forward.1} parent=0 // pred_region
    _
  $region13: #{sdpose_forward.1} parent=0 // pred_fallthru
    _
  %v17 = vld [vmem:[%s0] sm:$0xff]
  %v18 = vld [vmem:[%s0 + $0x8] sm:$0xff]
  %v19 = vlaneseq
  %v20 = vand.u32 %v19, 127
  %v21 = vadd.s32 %v20, 128
  %v22 = vand.u32 %v20, 15
  %v23 = vand.u32 %v21, 15
  %vm24 = vcmp.ne.s32.totalorder %v22, 0
  %vm25 = vcmp.ne.s32.totalorder %v23, 0
  %v26 = vsel %vm24, 1, 0
  %v27 = vsel %vm25, 1, 0
  %v28 = vcvt.s32.f32 %v26
  %v29 = vcvt.s32.f32 %v27
  %vm30 = vcmp.ne.s32.totalorder %v22, 15
  %vm31 = vcmp.ne.s32.totalorder %v23, 15
  %v32 = vsel %vm30, 1, 0
  %v33 = vsel %vm31, 1, 0
  %v34 = vcvt.s32.f32 %v32
  %v35 = vcvt.s32.f32 %v33
  %vm36 = vcmp.ge.s32.totalorder %v20, 16
  %vm37 = vcmp.ge.s32.totalorder %v21, 16
  %vm38 = vcmp.lt.s32.totalorder %v20, 240
  %vm39 = vcmp.lt.s32.totalorder %v21, 240
  %40 = vrot.lane.b32.xlu0 %v17, 16
  %v41 = vpop.permute.xlu0 %40
  %42 = vrot.lane.b32.xlu0 %v18, 16
  %v43 = vpop.permute.xlu0 %42
  %vm44 = vcmp.lt.s32.totalorder %v20, 16
  %v45 = vsel %vm44, %v41, %v43
  %v46 = vsel %vm44, %v43, %v41
  %v47 = vsel %vm36, %v46, 0.0
  %v48 = vsel %vm37, %v45, 0.0
  %v49 = vld [vmem:[%s1] sm:$0xff]
  %50 = vrot.lane.b32.xlu0 %v47, 1
  %v51 = vpop.permute.xlu0 %50
  %52 = vrot.lane.b32.xlu0 %v48, 1
  %v53 = vpop.permute.xlu0 %52
  %vm54 = vcmp.lt.s32.totalorder %v20, 1
  %v55 = vsel %vm54, %v51, %v53
  %v56 = vsel %vm54, %v53, %v51
  %58 = vset.pattern.permute.xlu0 0
  %59 = vperm.xlu0 %58, %v49
  %v60 = vpop.permute.xlu0 %59
  %v62 = vmul.f32 %v56, %v60
  %v63 = vmul.f32 %v55, %v60
  %v64 = vadd.f32 %v62, 0.0
  %v65 = vadd.f32 %v63, 0.0
  %66 = vset.pattern.permute.xlu0 1
  %67 = vperm.xlu0 %66, %v49
  %v68 = vpop.permute.xlu0 %67
  %v70 = vmul.f32 %v47, %v68
  %v71 = vmul.f32 %v48, %v68
  %v72 = vadd.f32 %v70, 0.0
  %v73 = vadd.f32 %v71, 0.0
  %74 = vrot.lane.b32.xlu0 %v47, 127
  %v75 = vpop.permute.xlu0 %74
  %76 = vrot.lane.b32.xlu0 %v48, 127
  %v77 = vpop.permute.xlu0 %76
  %vm78 = vcmp.lt.s32.totalorder %v20, 127
  %v79 = vsel %vm78, %v75, %v77
  %v80 = vsel %vm78, %v77, %v75
  %81 = vset.pattern.permute.xlu0 2
  %82 = vperm.xlu0 %81, %v49
  %v83 = vpop.permute.xlu0 %82
  %v85 = vmul.f32 %v79, %v83
  %v86 = vmul.f32 %v80, %v83
  %v87 = vadd.f32 %v85, 0.0
  %v88 = vadd.f32 %v86, 0.0
  %89 = vrot.lane.b32.xlu0 %v17, 1
  %v90 = vpop.permute.xlu0 %89
  %91 = vrot.lane.b32.xlu0 %v18, 1
  %v92 = vpop.permute.xlu0 %91
  %v93 = vsel %vm54, %v90, %v92
  %v94 = vsel %vm54, %v92, %v90
  %95 = vset.pattern.permute.xlu0 3
  %96 = vperm.xlu0 %95, %v49
  %v97 = vpop.permute.xlu0 %96
  %v99 = vmul.f32 %v94, %v97
  %v100 = vmul.f32 %v93, %v97
  %v101 = vadd.f32 %v64, %v99
  %v102 = vadd.f32 %v65, %v100
  %103 = vset.pattern.permute.xlu0 4
  %104 = vperm.xlu0 %103, %v49
  %v105 = vpop.permute.xlu0 %104
  %v107 = vmul.f32 %v17, %v105
  %v108 = vmul.f32 %v18, %v105
  %v109 = vadd.f32 %v72, %v107
  %v110 = vadd.f32 %v73, %v108
  %111 = vrot.lane.b32.xlu0 %v17, 127
  %v112 = vpop.permute.xlu0 %111
  %113 = vrot.lane.b32.xlu0 %v18, 127
  %v114 = vpop.permute.xlu0 %113
  %v115 = vsel %vm78, %v112, %v114
  %v116 = vsel %vm78, %v114, %v112
  %117 = vset.pattern.permute.xlu0 5
  %118 = vperm.xlu0 %117, %v49
  %v119 = vpop.permute.xlu0 %118
  %v121 = vmul.f32 %v115, %v119
  %v122 = vmul.f32 %v116, %v119
  %v123 = vadd.f32 %v87, %v121
  %v124 = vadd.f32 %v88, %v122
  %125 = vrot.lane.b32.xlu0 %v17, 112
  %v126 = vpop.permute.xlu0 %125
  %127 = vrot.lane.b32.xlu0 %v18, 112
  %v128 = vpop.permute.xlu0 %127
  %vm129 = vcmp.lt.s32.totalorder %v20, 112
  %v130 = vsel %vm129, %v126, %v128
  %v131 = vsel %vm129, %v128, %v126
  %v132 = vsel %vm38, %v130, 0.0
  %v133 = vsel %vm39, %v131, 0.0
  %134 = vrot.lane.b32.xlu0 %v132, 1
  %v135 = vpop.permute.xlu0 %134
  %136 = vrot.lane.b32.xlu0 %v133, 1
  %v137 = vpop.permute.xlu0 %136
  %v138 = vsel %vm54, %v135, %v137
  %v139 = vsel %vm54, %v137, %v135
  %140 = vset.pattern.permute.xlu0 6
  %141 = vperm.xlu0 %140, %v49
  %v142 = vpop.permute.xlu0 %141
  %v144 = vmul.f32 %v139, %v142
  %v145 = vmul.f32 %v138, %v142
  %v146 = vadd.f32 %v101, %v144
  %v147 = vadd.f32 %v102, %v145
  %148 = vset.pattern.permute.xlu0 7
  %149 = vperm.xlu0 %148, %v49
  %v150 = vpop.permute.xlu0 %149
  %v152 = vmul.f32 %v132, %v150
  %v153 = vmul.f32 %v133, %v150
  %v154 = vadd.f32 %v109, %v152
  %v155 = vadd.f32 %v110, %v153
  %156 = vrot.lane.b32.xlu0 %v132, 127
  %v157 = vpop.permute.xlu0 %156
  %158 = vrot.lane.b32.xlu0 %v133, 127
  %v159 = vpop.permute.xlu0 %158
  %v160 = vsel %vm78, %v157, %v159
  %v161 = vsel %vm78, %v159, %v157
  %162 = vset.pattern.permute.xlu0 8
  %163 = vperm.xlu0 %162, %v49
  %v164 = vpop.permute.xlu0 %163
  %v166 = vmul.f32 %v160, %v164
  %v167 = vmul.f32 %v161, %v164
  %v168 = vadd.f32 %v123, %v166
  %v169 = vadd.f32 %v124, %v167
  %v170 = vmul.f32 %v146, %v28
  %v171 = vmul.f32 %v147, %v29
  %v172 = vadd.f32 %v170, %v154
  %v173 = vadd.f32 %v171, %v155
  %v174 = vmul.f32 %v168, %v34
  %v175 = vmul.f32 %v169, %v35
  %v176 = vadd.f32 %v172, %v174
  %v177 = vadd.f32 %v173, %v175
  %v180 = vrot.slane %v176, 2
  %v181 = vrot.slane %v177, 2
  %v184 = vadd.f32 %v176, %v180
  %v185 = vadd.f32 %v177, %v181
  %v186 = vrot.slane %v176, 4
  %v187 = vrot.slane %v177, 4
  %v190 = vadd.f32 %v184, %v186
  %v191 = vadd.f32 %v185, %v187
  %v192 = vrot.slane %v176, 6
  %v193 = vrot.slane %v177, 6
  %v196 = vadd.f32 %v190, %v192
  %v197 = vadd.f32 %v191, %v193
  %s198 = sld [smem:[#allocation2]]
  %v199 = vstv %s198
  %v200 = vadd.f32 %v196, %v199
  %v201 = vadd.f32 %v197, %v199
  %v204 = vcombine.low %v200, %v201
  %v206 = vunpack.c.l.s4 1983009808
  %v207 = vunpack.c.0.s8 %v206
  %v208 = vlaneseq
  %v209 = vshrl.u32 %v208, 7
  %v210 = vsub.s32 %v207, %v209
  %v211 = vrot.slane %v204, %v210
  %213 = vst [vmem:[%s3] sm:$0xf] %v211
  %214 = vrot.lane.b32.xlu0 %v200, 127
  %v215 = vpop.permute.xlu0 %214
  %216 = vrot.lane.b32.xlu0 %v201, 127
  %v217 = vpop.permute.xlu0 %216
  %v218 = vsel %vm78, %v215, %v217
  %v219 = vsel %vm78, %v217, %v215
  %220 = vrot.lane.b32.xlu0 %v200, 126
  %v221 = vpop.permute.xlu0 %220
  %222 = vrot.lane.b32.xlu0 %v201, 126
  %v223 = vpop.permute.xlu0 %222
  %vm224 = vcmp.lt.s32.totalorder %v20, 126
  %v225 = vsel %vm224, %v221, %v223
  %v226 = vsel %vm224, %v223, %v221
  %227 = vrot.lane.b32.xlu0 %v200, 125
  %v228 = vpop.permute.xlu0 %227
  %229 = vrot.lane.b32.xlu0 %v201, 125
  %v230 = vpop.permute.xlu0 %229
  %vm231 = vcmp.lt.s32.totalorder %v20, 125
  %v232 = vsel %vm231, %v228, %v230
  %v233 = vsel %vm231, %v230, %v228
  %234 = vrot.lane.b32.xlu0 %v200, 124
  %v235 = vpop.permute.xlu0 %234
  %236 = vrot.lane.b32.xlu0 %v201, 124
  %v237 = vpop.permute.xlu0 %236
  %vm238 = vcmp.lt.s32.totalorder %v20, 124
  %v239 = vsel %vm238, %v235, %v237
  %v240 = vsel %vm238, %v237, %v235
  %241 = vrot.lane.b32.xlu0 %v200, 123
  %v242 = vpop.permute.xlu0 %241
  %243 = vrot.lane.b32.xlu0 %v201, 123
  %v244 = vpop.permute.xlu0 %243
  %vm245 = vcmp.lt.s32.totalorder %v20, 123
  %v246 = vsel %vm245, %v242, %v244
  %v247 = vsel %vm245, %v244, %v242
  %v248 = vmul.f32 %v200, %v200
  %v249 = vmul.f32 %v201, %v201
  %v250 = vmul.f32 %v218, %v218
  %v251 = vmul.f32 %v219, %v219
  %v252 = vadd.f32 %v248, %v250
  %v253 = vadd.f32 %v249, %v251
  %v254 = vmul.f32 %v225, %v225
  %v255 = vmul.f32 %v226, %v226
  %v256 = vadd.f32 %v252, %v254
  %v257 = vadd.f32 %v253, %v255
  %v258 = vmax.f32 %v256, 1e-24
  %v259 = vmax.f32 %v257, 1e-24
  %v260 = vrsqrt.pop %v258
  %v261 = vrsqrt.pop %v259
  %v262 = vmul.f32 %v200, %v260
  %v263 = vmul.f32 %v201, %v261
  %v264 = vmul.f32 %v218, %v260
  %v265 = vmul.f32 %v219, %v261
  %v266 = vmul.f32 %v225, %v260
  %v267 = vmul.f32 %v226, %v261
  %v268 = vmul.f32 %v262, %v232
  %v269 = vmul.f32 %v263, %v233
  %v270 = vmul.f32 %v264, %v239
  %v271 = vmul.f32 %v265, %v240
  %v272 = vadd.f32 %v268, %v270
  %v273 = vadd.f32 %v269, %v271
  %v274 = vmul.f32 %v266, %v246
  %v275 = vmul.f32 %v267, %v247
  %v276 = vadd.f32 %v272, %v274
  %v277 = vadd.f32 %v273, %v275
  %v278 = vmul.f32 %v276, %v262
  %v279 = vmul.f32 %v277, %v263
  %v280 = vsub.f32 %v232, %v278
  %v281 = vsub.f32 %v233, %v279
  %v282 = vmul.f32 %v276, %v264
  %v283 = vmul.f32 %v277, %v265
  %v284 = vsub.f32 %v239, %v282
  %v285 = vsub.f32 %v240, %v283
  %v286 = vmul.f32 %v276, %v266
  %v287 = vmul.f32 %v277, %v267
  %v288 = vsub.f32 %v246, %v286
  %v289 = vsub.f32 %v247, %v287
  %v290 = vmul.f32 %v280, %v280
  %v291 = vmul.f32 %v281, %v281
  %v292 = vmul.f32 %v284, %v284
  %v293 = vmul.f32 %v285, %v285
  %v294 = vadd.f32 %v290, %v292
  %v295 = vadd.f32 %v291, %v293
  %v296 = vmul.f32 %v288, %v288
  %v297 = vmul.f32 %v289, %v289
  %v298 = vadd.f32 %v294, %v296
  %v299 = vadd.f32 %v295, %v297
  %v300 = vmax.f32 %v298, 1e-24
  %v301 = vmax.f32 %v299, 1e-24
  %v302 = vrsqrt.pop %v300
  %v303 = vrsqrt.pop %v301
  %v304 = vmul.f32 %v280, %v302
  %v305 = vmul.f32 %v281, %v303
  %v306 = vmul.f32 %v284, %v302
  %v307 = vmul.f32 %v285, %v303
  %v308 = vmul.f32 %v288, %v302
  %v309 = vmul.f32 %v289, %v303
  %v310 = vmul.f32 %v264, %v308
  %v311 = vmul.f32 %v265, %v309
  %v312 = vmul.f32 %v266, %v306
  %v313 = vmul.f32 %v267, %v307
  %v314 = vsub.f32 %v310, %v312
  %v315 = vsub.f32 %v311, %v313
  %v316 = vmul.f32 %v266, %v304
  %v317 = vmul.f32 %v267, %v305
  %v318 = vmul.f32 %v262, %v308
  %v319 = vmul.f32 %v263, %v309
  %v320 = vsub.f32 %v316, %v318
  %v321 = vsub.f32 %v317, %v319
  %v322 = vmul.f32 %v262, %v306
  %v323 = vmul.f32 %v263, %v307
  %v324 = vmul.f32 %v264, %v304
  %v325 = vmul.f32 %v265, %v305
  %v326 = vsub.f32 %v322, %v324
  %v327 = vsub.f32 %v323, %v325
  %v330 = vcombine.low %v262, %v263
  %v332 = vunpack.c.l.s4 1983009808
  %v333 = vunpack.c.0.s8 %v332
  %v334 = vlaneseq
  %v335 = vshrl.u32 %v334, 7
  %v336 = vsub.s32 %v333, %v335
  %v337 = vrot.slane %v330, %v336
  %339 = vst [vmem:[%s4] sm:$0xf] %v337
  %v342 = vcombine.low %v264, %v265
  %v344 = vunpack.c.l.s4 1983009808
  %v345 = vunpack.c.0.s8 %v344
  %v346 = vlaneseq
  %v347 = vshrl.u32 %v346, 7
  %v348 = vsub.s32 %v345, %v347
  %v349 = vrot.slane %v342, %v348
  %s351 = scalar_lea.vmem %s4, 4
  %352 = vst [vmem:[%s351] sm:$0xf] %v349
  %v355 = vcombine.low %v266, %v267
  %v357 = vunpack.c.l.s4 1983009808
  %v358 = vunpack.c.0.s8 %v357
  %v359 = vlaneseq
  %v360 = vshrl.u32 %v359, 7
  %v361 = vsub.s32 %v358, %v360
  %v362 = vrot.slane %v355, %v361
  %s364 = scalar_lea.vmem %s4, 8
  %365 = vst [vmem:[%s364] sm:$0xf] %v362
  %v368 = vcombine.low %v304, %v305
  %v370 = vunpack.c.l.s4 1983009808
  %v371 = vunpack.c.0.s8 %v370
  %v372 = vlaneseq
  %v373 = vshrl.u32 %v372, 7
  %v374 = vsub.s32 %v371, %v373
  %v375 = vrot.slane %v368, %v374
  %s377 = scalar_lea.vmem %s4, 12
  %378 = vst [vmem:[%s377] sm:$0xf] %v375
  %v381 = vcombine.low %v306, %v307
  %v383 = vunpack.c.l.s4 1983009808
  %v384 = vunpack.c.0.s8 %v383
  %v385 = vlaneseq
  %v386 = vshrl.u32 %v385, 7
  %v387 = vsub.s32 %v384, %v386
  %v388 = vrot.slane %v381, %v387
  %s390 = scalar_lea.vmem %s4, 16
  %391 = vst [vmem:[%s390] sm:$0xf] %v388
  %v394 = vcombine.low %v308, %v309
  %v396 = vunpack.c.l.s4 1983009808
  %v397 = vunpack.c.0.s8 %v396
  %v398 = vlaneseq
  %v399 = vshrl.u32 %v398, 7
  %v400 = vsub.s32 %v397, %v399
  %v401 = vrot.slane %v394, %v400
  %s403 = scalar_lea.vmem %s4, 20
  %404 = vst [vmem:[%s403] sm:$0xf] %v401
  %v407 = vcombine.low %v314, %v315
  %v409 = vunpack.c.l.s4 1983009808
  %v410 = vunpack.c.0.s8 %v409
  %v411 = vlaneseq
  %v412 = vshrl.u32 %v411, 7
  %v413 = vsub.s32 %v410, %v412
  %v414 = vrot.slane %v407, %v413
  %s416 = scalar_lea.vmem %s4, 24
  %417 = vst [vmem:[%s416] sm:$0xf] %v414
  %v420 = vcombine.low %v320, %v321
  %v422 = vunpack.c.l.s4 1983009808
  %v423 = vunpack.c.0.s8 %v422
  %v424 = vlaneseq
  %v425 = vshrl.u32 %v424, 7
  %v426 = vsub.s32 %v423, %v425
  %v427 = vrot.slane %v420, %v426
  %s429 = scalar_lea.vmem %s4, 28
  %430 = vst [vmem:[%s429] sm:$0xf] %v427
  %v433 = vcombine.low %v326, %v327
  %v435 = vunpack.c.l.s4 1983009808
  %v436 = vunpack.c.0.s8 %v435
  %v437 = vlaneseq
  %v438 = vshrl.u32 %v437, 7
  %v439 = vsub.s32 %v436, %v438
  %v440 = vrot.slane %v433, %v439
  %s442 = scalar_lea.vmem %s4, 32
  %443 = vst [vmem:[%s442] sm:$0xf] %v440
  // Predicated region
  $region14: #{sdpose_forward.1} parent=0 // pred_check
    _
  $region15: #{sdpose_forward.1} parent=0 // pred_check_branch
    %445 = sbr.rel (0) target = $region17
  $region16: #{sdpose_forward.1} parent=0 // pred_region
    _
  $region17: #{sdpose_forward.1} parent=0 // pred_fallthru
    _
  // Predicated region
  $region18: #{sdpose_forward.1} parent=0 // pred_check
    _
  $region19: #{sdpose_forward.1} parent=0 // pred_check_branch
    %447 = sbr.rel (0) target = $region21
  $region20: #{sdpose_forward.1} parent=0 // pred_region
    _
  $region21: #{sdpose_forward.1} parent=0 // pred_fallthru
    _
  // Predicated region
  $region22: #{sdpose_forward.1} parent=0 // pred_check
    _
  $region23: #{sdpose_forward.1} parent=0 // pred_check_branch
    %449 = sbr.rel (0) target = $region25
  $region24: #{sdpose_forward.1} parent=0 // pred_region
    _
  $region25: #{sdpose_forward.1} parent=0 // pred_fallthru
    _
  // Predicated region
  $region26: #{sdpose_forward.1} parent=0 // pred_check
    _
  $region27: #{sdpose_forward.1} parent=0 // pred_check_branch
    %451 = sbr.rel (0) target = $region29
  $region28: #{sdpose_forward.1} parent=0 // pred_region
    _
  $region29: #{sdpose_forward.1} parent=0 // pred_fallthru
    _

</llo_original>
